<compile_context>
chip_gen: v6e
topology: v6e:2x2x1
jax: 0.10.0
libtpu: 0.0.40
codegen_flags: <defaults>
</compile_context>

<pallas_src>
import math

import jax
import jax.numpy as jnp
import numpy as np
from jax.experimental import pallas as pl
from jax.experimental.pallas import tpu as pltpu


def _round_up(x, m):
    return ((x + m - 1) // m) * m


def _gaussian_upsampling_kernel(t_ref, c_ref, dm_ref, hs_ref, out_ref, attn_ref):
    # t_ref  : (1, TQ, 1)          sqrt(delta)-scaled, h_mask-ed frame positions
    # c_ref  : (1, 1, Tt_pad)      sqrt(delta)-scaled gaussian centers (q-invariant)
    # dm_ref : (1, 1, Tt_pad)      token mask, padding lanes are 0 (q-invariant)
    # hs_ref : (1, Tt_pad, A_pad)  hidden states, bf16, zero padded (q-invariant)
    t = t_ref[0]                                       # (TQ, 1)
    c = c_ref[0]                                       # (1, Tt)
    dm = dm_ref[0]                                     # (1, Tt)

    diff = t - c                                       # (TQ, Tt); delta already folded in
    energy = jnp.where(dm > 0.0, -(diff * diff), -jnp.inf)

    # softmax over the token axis (dim=2 in the PyTorch module)
    m = jnp.max(energy, axis=-1, keepdims=True)
    p = jnp.exp(energy - m)
    s = jnp.sum(p, axis=-1, keepdims=True)
    attn = p * pl.reciprocal(s, approx=False)          # EUP reciprocal, exact

    attn_ref[0] = attn.astype(attn_ref.dtype)
    # bf16 x bf16 matmul with f32 accumulation on the MXU.
    out_ref[0] = jnp.dot(attn.astype(jnp.bfloat16), hs_ref[0],
                         preferred_element_type=jnp.float32).astype(out_ref.dtype)


def gaussian_upsampling(hs, ds, h_masks=None, d_masks=None, delta=0.1, tq=256):
    """Pallas implementation of GaussianUpsampling.forward.

    Returns (expanded_hs (B, T_feats, adim), p_attn (B, T_feats, T_text)).
    """
    hs = jnp.asarray(hs, jnp.float32)
    ds = jnp.asarray(ds, jnp.float32)
    B, T_text, adim = hs.shape

    # Degenerate case from the PyTorch module: if all durations are zero,
    # set zero-sum rows to 1.
    total = ds.sum()
    row_sum = ds.sum(axis=1, keepdims=True)
    ds = jnp.where((total == 0) & (row_sum == 0), jnp.ones_like(ds), ds)

    if h_masks is None:
        # TODO(synk): dynamic T_feats (= ds.sum()) needs a concrete value; host sync here.
        T_feats = int(jax.device_get(ds.sum()))
        hm = jnp.ones((B, T_feats), jnp.float32)
    else:
        T_feats = h_masks.shape[-1]
        hm = jnp.asarray(h_masks, jnp.float32)

    if d_masks is None:
        dm = jnp.ones((B, T_text), jnp.float32)
    else:
        dm = jnp.asarray(d_masks, jnp.float32)

    sqrt_delta = math.sqrt(float(delta))

    # Tile / pad sizes: lane-dense (multiple of 128) token & feature dims,
    # sublane-aligned frame tile.
    TQ = tq if T_feats >= tq else _round_up(T_feats, 8)
    Tf_pad = _round_up(T_feats, TQ)
    Tt_pad = _round_up(T_text, 128)
    A_pad = _round_up(adim, 128)
    n_q = Tf_pad // TQ

    # Frame positions with delta folded in (padded frames get 0, matching t*h_mask).
    t = jnp.arange(T_feats, dtype=jnp.float32)[None, :] * hm * sqrt_delta
    t = jnp.pad(t, ((0, 0), (0, Tf_pad - T_feats)))[:, :, None]            # (B, Tf_pad, 1)

    # Gaussian centers with delta folded in; padded tokens are masked via dm.
    c = (jnp.cumsum(ds, axis=-1) - ds / 2.0) * sqrt_delta
    c = jnp.pad(c, ((0, 0), (0, Tt_pad - T_text)))[:, None, :]             # (B, 1, Tt_pad)

    dm3 = jnp.pad(dm, ((0, 0), (0, Tt_pad - T_text)))[:, None, :]          # (B, 1, Tt_pad)

    hs_p = jnp.pad(hs, ((0, 0), (0, Tt_pad - T_text), (0, A_pad - adim)))
    hs_p = hs_p.astype(jnp.bfloat16)                                       # (B, Tt_pad, A_pad)

    out, attn = pl.pallas_call(
        _gaussian_upsampling_kernel,
        out_shape=(
            jax.ShapeDtypeStruct((B, Tf_pad, A_pad), jnp.float32),
            jax.ShapeDtypeStruct((B, Tf_pad, Tt_pad), jnp.float32),
        ),
        grid=(B, n_q),
        in_specs=[
            pl.BlockSpec((1, TQ, 1), lambda b, q: (b, q, 0)),        # t: per-q tile
            pl.BlockSpec((1, 1, Tt_pad), lambda b, q: (b, 0, 0)),    # c: resident across q
            pl.BlockSpec((1, 1, Tt_pad), lambda b, q: (b, 0, 0)),    # dm: resident across q
            pl.BlockSpec((1, Tt_pad, A_pad), lambda b, q: (b, 0, 0)),  # hs: resident across q
        ],
        out_specs=(
            pl.BlockSpec((1, TQ, A_pad), lambda b, q: (b, q, 0)),
            pl.BlockSpec((1, TQ, Tt_pad), lambda b, q: (b, q, 0)),
        ),
        compiler_params=pltpu.CompilerParams(
            dimension_semantics=("parallel", "parallel"),
            vmem_limit_bytes=48 * 1024 * 1024,
        ),
    )(t, c, dm3, hs_p)

    # Strip padding.
    return out[:, :T_feats, :adim], attn[:, :T_feats, :T_text]


def _reference(hs, ds, h_masks, d_masks, delta=0.1):
    """Pure-JAX reference matching the PyTorch module."""
    B, T_text, adim = hs.shape
    T_feats = h_masks.shape[-1]
    t = jnp.arange(T_feats, dtype=jnp.float32)[None, :] * h_masks.astype(jnp.float32)
    c = jnp.cumsum(ds, axis=-1) - ds / 2.0
    energy = -delta * (t[:, :, None] - c[:, None, :]) ** 2
    energy = jnp.where(d_masks[:, None, :].astype(bool), energy, -jnp.inf)
    p_attn = jax.nn.softmax(energy, axis=2)
    out = jnp.matmul(p_attn, hs)
    return out, p_attn


if __name__ == "__main__":
    key = jax.random.PRNGKey(0)
    k_hs, k_ds = jax.random.split(key)

    B, T_text, adim, T_feats = 2, 8, 32, 16

    hs = jax.random.normal(k_hs, (B, T_text, adim), dtype=jnp.float32)
    ds = jax.random.randint(k_ds, (B, T_text), 1, 3).astype(jnp.float32)      # durations 1..2

    feat_lens = jnp.minimum(ds.sum(axis=1), T_feats)
    h_masks = (jnp.arange(T_feats)[None, :] < feat_lens[:, None]).astype(jnp.float32)
    text_lens = jnp.array([8, 6], dtype=jnp.int32)
    d_masks = (jnp.arange(T_text)[None, :] < text_lens[:, None]).astype(jnp.float32)

    out, attn = gaussian_upsampling(hs, ds, h_masks, d_masks, delta=0.1)
    out = jax.block_until_ready(out)
    attn = jax.block_until_ready(attn)

    out_ref, attn_ref = _reference(hs, ds, h_masks, d_masks, delta=0.1)

    # attn is computed fully in f32 -> tight tolerance.
    np.testing.assert_allclose(np.asarray(attn), np.asarray(attn_ref), rtol=1e-5, atol=1e-5)
    # out uses a bf16 MXU matmul with f32 accumulation -> bf16-level tolerance.
    np.testing.assert_allclose(np.asarray(out), np.asarray(out_ref), rtol=2e-2, atol=2e-2)

    print("KERNEL_OK")
</pallas_src>

<mosaic_0001>
module attributes {stable_mosaic.version = 11 : i64} {
  func.func @_gaussian_upsampling_kernel(%arg0: i32, %arg1: i32, %arg2: memref<1x16x1xf32, #tpu.memory_space<vmem>>, %arg3: memref<1x1x128xf32, #tpu.memory_space<vmem>>, %arg4: memref<1x1x128xf32, #tpu.memory_space<vmem>>, %arg5: memref<1x128x128xbf16, #tpu.memory_space<vmem>>, %arg6: memref<1x16x128xf32, #tpu.memory_space<vmem>>, %arg7: memref<1x16x128xf32, #tpu.memory_space<vmem>>) attributes {dimension_semantics = [#tpu.dimension_semantics<parallel>, #tpu.dimension_semantics<parallel>], iteration_bounds = array<i64: 2, 1>, scalar_prefetch = 0 : i64, scratch_operands = 0 : i64, tpu.core_type = #tpu.core_type<tc>, window_params = [{transform_indices = @transform_0, window_bounds = array<i64: 1, 16, 1>}, {transform_indices = @transform_1, window_bounds = array<i64: 1, 1, 128>}, {transform_indices = @transform_2, window_bounds = array<i64: 1, 1, 128>}, {transform_indices = @transform_3, window_bounds = array<i64: 1, 128, 128>}, {transform_indices = @transform_4, window_bounds = array<i64: 1, 16, 128>}, {transform_indices = @transform_5, window_bounds = array<i64: 1, 16, 128>}]} {
    %c0 = arith.constant 0 : index
    %c0_0 = arith.constant 0 : index
    %c0_1 = arith.constant 0 : index
    %0 = vector.load %arg2[%c0, %c0_0, %c0_1] : memref<1x16x1xf32, #tpu.memory_space<vmem>>, vector<1x16x1xf32>
    %1 = vector.shape_cast %0 : vector<1x16x1xf32> to vector<16x1xf32>
    %c0_2 = arith.constant 0 : index
    %c0_3 = arith.constant 0 : index
    %c0_4 = arith.constant 0 : index
    %2 = vector.load %arg3[%c0_2, %c0_3, %c0_4] : memref<1x1x128xf32, #tpu.memory_space<vmem>>, vector<1x1x128xf32>
    %3 = vector.shape_cast %2 : vector<1x1x128xf32> to vector<1x128xf32>
    %c0_5 = arith.constant 0 : index
    %c0_6 = arith.constant 0 : index
    %c0_7 = arith.constant 0 : index
    %4 = vector.load %arg4[%c0_5, %c0_6, %c0_7] : memref<1x1x128xf32, #tpu.memory_space<vmem>>, vector<1x1x128xf32>
    %5 = vector.shape_cast %4 : vector<1x1x128xf32> to vector<1x128xf32>
    %6 = vector.broadcast %1 : vector<16x1xf32> to vector<16x128xf32>
    %7 = vector.broadcast %3 : vector<1x128xf32> to vector<16x128xf32>
    %8 = arith.subf %6, %7 : vector<16x128xf32>
    %cst = arith.constant 0.000000e+00 : f32
    %9 = vector.broadcast %cst : f32 to vector<1x128xf32>
    %10 = arith.cmpf ogt, %5, %9 : vector<1x128xf32>
    %11 = arith.mulf %8, %8 : vector<16x128xf32>
    %cst_8 = arith.constant 0.000000e+00 : f32
    %12 = vector.broadcast %cst_8 : f32 to vector<16x128xf32>
    %13 = arith.subf %12, %11 : vector<16x128xf32>
    %cst_9 = arith.constant 0xFF800000 : f32
    %14 = vector.shape_cast %10 : vector<1x128xi1> to vector<1x128xi1>
    %15 = vector.broadcast %14 : vector<1x128xi1> to vector<16x128xi1>
    %16 = vector.broadcast %cst_9 : f32 to vector<16x128xf32>
    %17 = arith.select %15, %13, %16 : vector<16x128xi1>, vector<16x128xf32>
    %cst_10 = arith.constant dense<0xFF800000> : vector<16xf32>
    %18 = vector.multi_reduction <maximumf>, %17, %cst_10 [1] : vector<16x128xf32> to vector<16xf32>
    %19 = vector.shape_cast %18 : vector<16xf32> to vector<16x1xf32>
    %20 = vector.broadcast %19 : vector<16x1xf32> to vector<16x128xf32>
    %21 = arith.subf %17, %20 : vector<16x128xf32>
    %22 = math.exp %21 : vector<16x128xf32>
    %cst_11 = arith.constant dense<0.000000e+00> : vector<16xf32>
    %23 = vector.multi_reduction <add>, %22, %cst_11 [1] : vector<16x128xf32> to vector<16xf32>
    %24 = vector.shape_cast %23 : vector<16xf32> to vector<16x1xf32>
    %25 = tpu.reciprocal %24 : vector<16x1xf32> -> vector<16x1xf32>
    %26 = vector.broadcast %25 : vector<16x1xf32> to vector<16x128xf32>
    %27 = arith.mulf %22, %26 : vector<16x128xf32>
    %c0_12 = arith.constant 0 : index
    %c0_13 = arith.constant 0 : index
    %c0_14 = arith.constant 0 : index
    %28 = vector.load %arg7[%c0_12, %c0_13, %c0_14] : memref<1x16x128xf32, #tpu.memory_space<vmem>>, vector<1x16x128xf32>
    %29 = vector.shape_cast %28 : vector<1x16x128xf32> to vector<16x128xf32>
    %30 = vector.shape_cast %27 : vector<16x128xf32> to vector<1x16x128xf32>
    tpu.vector_store %arg7[%c0_12, %c0_13, %c0_14], %30 {strides = array<i32>} : memref<1x16x128xf32, #tpu.memory_space<vmem>>, vector<1x16x128xf32>,
    %31 = arith.truncf %27 : vector<16x128xf32> to vector<16x128xbf16>
    %c0_15 = arith.constant 0 : index
    %c0_16 = arith.constant 0 : index
    %c0_17 = arith.constant 0 : index
    %32 = vector.load %arg5[%c0_15, %c0_16, %c0_17] : memref<1x128x128xbf16, #tpu.memory_space<vmem>>, vector<1x128x128xbf16>
    %33 = vector.shape_cast %32 : vector<1x128x128xbf16> to vector<128x128xbf16>
    %cst_18 = arith.constant dense<0.000000e+00> : vector<16x128xf32>
    %34 = tpu.matmul %31, %33, %cst_18 {dimension_numbers = #tpu.dot_dimension_numbers<[1], [0], [0], [1], [0, 0, 1, 1], [], []>} : vector<16x128xbf16>, vector<128x128xbf16>, vector<16x128xf32> -> vector<16x128xf32>
    %c0_19 = arith.constant 0 : index
    %c0_20 = arith.constant 0 : index
    %c0_21 = arith.constant 0 : index
    %35 = vector.load %arg6[%c0_19, %c0_20, %c0_21] : memref<1x16x128xf32, #tpu.memory_space<vmem>>, vector<1x16x128xf32>
    %36 = vector.shape_cast %35 : vector<1x16x128xf32> to vector<16x128xf32>
    %37 = vector.shape_cast %34 : vector<16x128xf32> to vector<1x16x128xf32>
    tpu.vector_store %arg6[%c0_19, %c0_20, %c0_21], %37 {strides = array<i32>} : memref<1x16x128xf32, #tpu.memory_space<vmem>>, vector<1x16x128xf32>,
    return
  }
  func.func @transform_0(%arg0: i32, %arg1: i32) -> (i32, i32, i32) {
    %c0_i32 = arith.constant 0 : i32
    %c0_i32_0 = arith.constant 0 : i32
    return %arg0, %arg1, %c0_i32 : i32, i32, i32
  }
  func.func @transform_1(%arg0: i32, %arg1: i32) -> (i32, i32, i32) {
    %c0_i32 = arith.constant 0 : i32
    %c0_i32_0 = arith.constant 0 : i32
    %c0_i32_1 = arith.constant 0 : i32
    return %arg0, %c0_i32, %c0_i32_0 : i32, i32, i32
  }
  func.func @transform_2(%arg0: i32, %arg1: i32) -> (i32, i32, i32) {
    %c0_i32 = arith.constant 0 : i32
    %c0_i32_0 = arith.constant 0 : i32
    %c0_i32_1 = arith.constant 0 : i32
    return %arg0, %c0_i32, %c0_i32_0 : i32, i32, i32
  }
  func.func @transform_3(%arg0: i32, %arg1: i32) -> (i32, i32, i32) {
    %c0_i32 = arith.constant 0 : i32
    %c0_i32_0 = arith.constant 0 : i32
    %c0_i32_1 = arith.constant 0 : i32
    return %arg0, %c0_i32, %c0_i32_0 : i32, i32, i32
  }
  func.func @transform_4(%arg0: i32, %arg1: i32) -> (i32, i32, i32) {
    %c0_i32 = arith.constant 0 : i32
    %c0_i32_0 = arith.constant 0 : i32
    return %arg0, %arg1, %c0_i32 : i32, i32, i32
  }
  func.func @transform_5(%arg0: i32, %arg1: i32) -> (i32, i32, i32) {
    %c0_i32 = arith.constant 0 : i32
    %c0_i32_0 = arith.constant 0 : i32
    return %arg0, %arg1, %c0_i32 : i32, i32, i32
  }
}

</mosaic_0001>

<llo_original>
// kernel: tpu_custom_call.1
$region0: #{tpu_custom_call.1}
  #allocation0 [shape = 'u32[]', space=smem, size = 0x4, offset = 0x4, fixed_abs, tag = 'smem constant byte address 0x4 - core index']
  #allocation1 [shape = 'u32[144,128]{1,0:T(1,128)}', space=vmem, size = 0x12000, scoped, tag = 'internal scratch']
  %s0 = inlined_call_operand.vmem [shape: f32[2,16,1], index: 0, kind: input, shape index: {}]
  %s1 = inlined_call_operand.vmem [shape: f32[2,1,128], index: 1, kind: input, shape index: {}]
  %s2 = inlined_call_operand.vmem [shape: f32[2,1,128], index: 2, kind: input, shape index: {}]
  %s3 = inlined_call_operand.hbm [shape: bf16[2,128,128], index: 3, kind: input, shape index: {}]
  %s4 = inlined_call_operand.hbm [shape: f32[2,16,128], index: 4, kind: output, shape index: {0}]
  %s5 = inlined_call_operand.hbm [shape: f32[2,16,128], index: 5, kind: output, shape index: {1}]
  %6 = xla_tuple %s4, %s5
  %s7 = sld [smem:[#allocation0]]
  $region61: #{tpu_custom_call.1} parent=0
    _
  %s9 = ssub.s32 1, %s7
  %s10 = scalar_select 0, %s9, %s7
  $region1: #{tpu_custom_call.1} parent=0
    #allocation2 [shape = 'u8[65536]{0}', space=vmem, size = 0x10000, scoped, tag = 'input window, operand 3']
    #allocation3 [shape = 's32[2]{0}', space=sflag, size = 0x8, scoped, tag = 'scoped memory for tpu_custom_call.1']
    #allocation4 [shape = 's32[2]{0}', space=sflag, size = 0x8, scoped, tag = 'scoped memory for tpu_custom_call.1']
    #allocation5 [shape = 'u8[16384]{0}', space=vmem, size = 0x4000, scoped, tag = 'output window, operand 0']
    #allocation6 [shape = 'u8[16384]{0}', space=vmem, size = 0x4000, scoped, tag = 'output window, operand 1']
    #allocation7 [shape = 's32[2]{0}', space=sflag, size = 0x8, scoped, tag = 'scoped memory for tpu_custom_call.1']
    %11 = vsyncpa [#allocation3], 0
    %s12 = scalar_lea.sflag [#allocation3], 1
    %13 = vsyncpa %s12, 0
    %14 = vsyncpa [#allocation4], 0
    %s15 = scalar_lea.sflag [#allocation4], 1
    %16 = vsyncpa %s15, 0
    %17 = vsyncpa [#allocation7], 0
    %s18 = scalar_lea.sflag [#allocation7], 1
    %19 = vsyncpa %s18, 0
    loop: start=0, step=1, limit=4
    $region2: #{tpu_custom_call.1} parent=1 // loop_pre_header
      _
    $region3: #{tpu_custom_call.1} parent=1 // loop_header
      %s21 = sphi 0, %s25
      %p22 = scmp.ge.s32.totalorder %s21, 4
      %s28 = sphi 0, %s40
      %s29 = sphi 0, %s36
      %s30 = sphi 0, %s28
      %s31 = sphi 0, %s29
      %s32 = sphi 0, %s30
      %s33 = sphi 0, %s31
      %s45 = sphi 0, %s47
      %s48 = sphi 0, %s45
      %s49 = sphi 0, %s48
      %s65 = sphi 0, %s49
      %s71 = sphi 0, %s73
      %s74 = sphi 0, %s71
      %s75 = sphi 0, %s74
      %s91 = sphi 0, %s75
      %s97 = sphi 0, %s99
      %s100 = sphi 0, %s97
      %s101 = sphi 0, %s100
      %s117 = sphi 0, %s101
      %s123 = sphi 0, %s125
      %s126 = sphi 0, %s123
      %s127 = sphi 0, %s126
      %s143 = sphi 0, %s127
      %s151 = sphi 0, %s153
      %s154 = sphi 0, %s151
      %s155 = sphi 0, %s154
      %s171 = sphi 0, %s155
      %s179 = sphi 0, %s181
      %s182 = sphi 0, %s179
      %s183 = sphi 0, %s182
      %s199 = sphi 0, %s183
    $region4: #{tpu_custom_call.1} parent=1 // loop_header_branch
      %24 = sbr.rel (%p22) target = $region8
    $region5: #{tpu_custom_call.1} parent=1 // loop_body
      %s26 = ssub.s32 %s21, 1
      %s27 = ssub.s32 %s21, 2
      %s34 = sadd.s32 1, %s29
      %p35 = scmp.ge.s32.totalorder %s34, 1
      %s36 = scalar_select %p35, 0, %s34
      %s37 = sadd.s32 1, %s28
      %s38 = scalar_select %p35, %s37, %s28
      %p39 = scmp.ge.s32.totalorder %s38, 2
      %s40 = scalar_select %p39, 0, %s38
      %s41 = ssub.s32 %s28, %s40
      %s42 = ssub.s32 %s29, %s36
      %s43 = sor.u32 %s41, %s42
      %p44 = scmp.eq.s32.totalorder %s43, 0
      %s46 = sadd.s32 %s45, 1
      %s47 = scalar_select %p44, %s45, %s46
      %p50 = pneg %p44
      %p51 = scmp.eq.s32.totalorder %s21, 1
      %p52 = por %p50, %p51
      %p53 = scmp.ne.s32.totalorder %s45, %s48
      %p54 = scmp.eq.s32.totalorder %s21, 0
      %p55 = por %p53, %p54
      %p56 = scmp.ne.s32.totalorder %s45, %s48
      %p57 = scmp.eq.s32.totalorder %s26, 1
      %p58 = por %p56, %p57
      %p59 = scmp.ne.s32.totalorder %s48, %s49
      %p60 = scmp.eq.s32.totalorder %s26, 0
      %p61 = por %p59, %p60
      %p62 = scmp.ne.s32.totalorder %s48, %s49
      %p63 = scmp.eq.s32.totalorder %s27, 1
      %p64 = por %p62, %p63
      %p66 = scmp.ne.s32.totalorder %s49, %s65
      %p67 = scmp.eq.s32.totalorder %s27, 0
      %p68 = por %p66, %p67
      %s69 = ssub.s32 %s28, %s40
      %p70 = scmp.eq.s32.totalorder %s69, 0
      %s72 = sadd.s32 %s71, 1
      %s73 = scalar_select %p70, %s71, %s72
      %p76 = pneg %p70
      %p77 = scmp.eq.s32.totalorder %s21, 1
      %p78 = por %p76, %p77
      %p79 = scmp.ne.s32.totalorder %s71, %s74
      %p80 = scmp.eq.s32.totalorder %s21, 0
      %p81 = por %p79, %p80
      %p82 = scmp.ne.s32.totalorder %s71, %s74
      %p83 = scmp.eq.s32.totalorder %s26, 1
      %p84 = por %p82, %p83
      %p85 = scmp.ne.s32.totalorder %s74, %s75
      %p86 = scmp.eq.s32.totalorder %s26, 0
      %p87 = por %p85, %p86
      %p88 = scmp.ne.s32.totalorder %s74, %s75
      %p89 = scmp.eq.s32.totalorder %s27, 1
      %p90 = por %p88, %p89
      %p92 = scmp.ne.s32.totalorder %s75, %s91
      %p93 = scmp.eq.s32.totalorder %s27, 0
      %p94 = por %p92, %p93
      %s95 = ssub.s32 %s28, %s40
      %p96 = scmp.eq.s32.totalorder %s95, 0
      %s98 = sadd.s32 %s97, 1
      %s99 = scalar_select %p96, %s97, %s98
      %p102 = pneg %p96
      %p103 = scmp.eq.s32.totalorder %s21, 1
      %p104 = por %p102, %p103
      %p105 = scmp.ne.s32.totalorder %s97, %s100
      %p106 = scmp.eq.s32.totalorder %s21, 0
      %p107 = por %p105, %p106
      %p108 = scmp.ne.s32.totalorder %s97, %s100
      %p109 = scmp.eq.s32.totalorder %s26, 1
      %p110 = por %p108, %p109
      %p111 = scmp.ne.s32.totalorder %s100, %s101
      %p112 = scmp.eq.s32.totalorder %s26, 0
      %p113 = por %p111, %p112
      %p114 = scmp.ne.s32.totalorder %s100, %s101
      %p115 = scmp.eq.s32.totalorder %s27, 1
      %p116 = por %p114, %p115
      %p118 = scmp.ne.s32.totalorder %s101, %s117
      %p119 = scmp.eq.s32.totalorder %s27, 0
      %p120 = por %p118, %p119
      %s121 = ssub.s32 %s28, %s40
      %p122 = scmp.eq.s32.totalorder %s121, 0
      %s124 = sadd.s32 %s123, 1
      %s125 = scalar_select %p122, %s123, %s124
      %p128 = pneg %p122
      %p129 = scmp.eq.s32.totalorder %s21, 1
      %p130 = por %p128, %p129
      %p131 = scmp.ne.s32.totalorder %s123, %s126
      %p132 = scmp.eq.s32.totalorder %s21, 0
      %p133 = por %p131, %p132
      %p134 = scmp.ne.s32.totalorder %s123, %s126
      %p135 = scmp.eq.s32.totalorder %s26, 1
      %p136 = por %p134, %p135
      %p137 = scmp.ne.s32.totalorder %s126, %s127
      %p138 = scmp.eq.s32.totalorder %s26, 0
      %p139 = por %p137, %p138
      %p140 = scmp.ne.s32.totalorder %s126, %s127
      %p141 = scmp.eq.s32.totalorder %s27, 1
      %p142 = por %p140, %p141
      %p144 = scmp.ne.s32.totalorder %s127, %s143
      %p145 = scmp.eq.s32.totalorder %s27, 0
      %p146 = por %p144, %p145
      %s147 = ssub.s32 %s28, %s40
      %s148 = ssub.s32 %s29, %s36
      %s149 = sor.u32 %s147, %s148
      %p150 = scmp.eq.s32.totalorder %s149, 0
      %s152 = sadd.s32 %s151, 1
      %s153 = scalar_select %p150, %s151, %s152
      %p156 = pneg %p150
      %p157 = scmp.eq.s32.totalorder %s21, 1
      %p158 = por %p156, %p157
      %p159 = scmp.ne.s32.totalorder %s151, %s154
      %p160 = scmp.eq.s32.totalorder %s21, 0
      %p161 = por %p159, %p160
      %p162 = scmp.ne.s32.totalorder %s151, %s154
      %p163 = scmp.eq.s32.totalorder %s26, 1
      %p164 = por %p162, %p163
      %p165 = scmp.ne.s32.totalorder %s154, %s155
      %p166 = scmp.eq.s32.totalorder %s26, 0
      %p167 = por %p165, %p166
      %p168 = scmp.ne.s32.totalorder %s154, %s155
      %p169 = scmp.eq.s32.totalorder %s27, 1
      %p170 = por %p168, %p169
      %p172 = scmp.ne.s32.totalorder %s155, %s171
      %p173 = scmp.eq.s32.totalorder %s27, 0
      %p174 = por %p172, %p173
      %s175 = ssub.s32 %s28, %s40
      %s176 = ssub.s32 %s29, %s36
      %s177 = sor.u32 %s175, %s176
      %p178 = scmp.eq.s32.totalorder %s177, 0
      %s180 = sadd.s32 %s179, 1
      %s181 = scalar_select %p178, %s179, %s180
      %p184 = pneg %p178
      %p185 = scmp.eq.s32.totalorder %s21, 1
      %p186 = por %p184, %p185
      %p187 = scmp.ne.s32.totalorder %s179, %s182
      %p188 = scmp.eq.s32.totalorder %s21, 0
      %p189 = por %p187, %p188
      %p190 = scmp.ne.s32.totalorder %s179, %s182
      %p191 = scmp.eq.s32.totalorder %s26, 1
      %p192 = por %p190, %p191
      %p193 = scmp.ne.s32.totalorder %s182, %s183
      %p194 = scmp.eq.s32.totalorder %s26, 0
      %p195 = por %p193, %p194
      %p196 = scmp.ne.s32.totalorder %s182, %s183
      %p197 = scmp.eq.s32.totalorder %s27, 1
      %p198 = por %p196, %p197
      %p200 = scmp.ne.s32.totalorder %s183, %s199
      %p201 = scmp.eq.s32.totalorder %s27, 0
      %p202 = por %p200, %p201
      %p203 = scmp.le.s32.totalorder 1, %s21
      %p204 = scmp.lt.s32.totalorder %s21, 3
      %p205 = pnand %p203, %p204
      %p206 = pneg %p205
      // Predicated region
      $region9: #{tpu_custom_call.1} parent=5 // pred_check
        _
      $region10: #{tpu_custom_call.1} parent=5 // pred_check_branch
        %208 = sbr.rel (%p205) target = $region12
      $region11: #{tpu_custom_call.1} parent=5 // pred_region
        %s209 = ssub.s32 %s21, 1
      $region12: #{tpu_custom_call.1} parent=5 // pred_fallthru
        _
      %p210 = scmp.lt.s32.totalorder %s21, 2
      // Predicated region
      $region13: #{tpu_custom_call.1} parent=5 // pred_check
        %p211 = pneg %p210
      $region14: #{tpu_custom_call.1} parent=5 // pred_check_branch
        %213 = sbr.rel (%p211) target = $region16
      $region15: #{tpu_custom_call.1} parent=5 // pred_region
        // Predicated region
        $region17: #{tpu_custom_call.1} parent=15 // pred_check
          %p214 = pneg %p55
        $region18: #{tpu_custom_call.1} parent=15 // pred_check_branch
          %216 = sbr.rel (%p214) target = $region20
        $region19: #{tpu_custom_call.1} parent=15 // pred_region
          %s217 = smul.u32 2, %s29
          %p218 = scmp.lt.s32.totalorder %s28, 1
          %s219 = scalar_select %p218, %s28, 1
          %p220 = scmp.lt.s32.totalorder %s217, 1
          %s221 = scalar_select %p220, %s217, 1
          %s222 = smul.addr %s219, 2
          %s223 = sadd.s32 %s221, %s222
          %s224 = smul.addr %s223, 8
          %s225 = scalar_lea.vmem %s0, %s224
          %s226 = smul.u32 2, %s29
        $region20: #{tpu_custom_call.1} parent=15 // pred_fallthru
          _
        // Predicated region
        $region21: #{tpu_custom_call.1} parent=15 // pred_check
          %p227 = pneg %p81
        $region22: #{tpu_custom_call.1} parent=15 // pred_check_branch
          %229 = sbr.rel (%p227) target = $region24
        $region23: #{tpu_custom_call.1} parent=15 // pred_region
          %p230 = scmp.lt.s32.totalorder %s28, 1
          %s231 = scalar_select %p230, %s28, 1
          %s232 = scalar_lea.vmem %s1, %s231
        $region24: #{tpu_custom_call.1} parent=15 // pred_fallthru
          _
        // Predicated region
        $region25: #{tpu_custom_call.1} parent=15 // pred_check
          %p233 = pneg %p107
        $region26: #{tpu_custom_call.1} parent=15 // pred_check_branch
          %235 = sbr.rel (%p233) target = $region28
        $region27: #{tpu_custom_call.1} parent=15 // pred_region
          %p236 = scmp.lt.s32.totalorder %s28, 1
          %s237 = scalar_select %p236, %s28, 1
          %s238 = scalar_lea.vmem %s2, %s237
        $region28: #{tpu_custom_call.1} parent=15 // pred_fallthru
          _
        // Predicated region
        $region29: #{tpu_custom_call.1} parent=15 // pred_check
          %p239 = pneg %p133
        $region30: #{tpu_custom_call.1} parent=15 // pred_check_branch
          %241 = sbr.rel (%p239) target = $region32
        $region31: #{tpu_custom_call.1} parent=15 // pred_region
          %s242 = sand.u32 %s123, 1
          %s243 = scalar_lea.sflag [#allocation3], %s242
          %s244 = sand.u32 %s123, 1
          %s245 = smul.addr %s244, 64
          %s246 = scalar_lea.vmem [#allocation2], %s245
          %s248 = ssub.s32 1024, 1024
          %249 = vsyncadd %s243, %s248
          %s250 = smul.addr %s28, 16
          %s251 = smul.addr %s250, 64
          %s252 = scalar_lea.hbm %s3, %s251
          %s253 = sshll.u32 %s246, 4
          %s254 = int_to_ptr.vmem [resolvable:$true] %s253
          %259 = dma.hbm_to_vmem [thread:$0]  %s252, 1024, %s254, %s243, 64, 64, 4
        $region32: #{tpu_custom_call.1} parent=15 // pred_fallthru
          _
      $region16: #{tpu_custom_call.1} parent=5 // pred_fallthru
        _
      %p260 = scmp.le.s32.totalorder 1, %s21
      %p261 = scmp.lt.s32.totalorder %s21, 3
      %p262 = pnand %p260, %p261
      %p263 = pneg %p262
      // Predicated region
      $region33: #{tpu_custom_call.1} parent=5 // pred_check
        _
      $region34: #{tpu_custom_call.1} parent=5 // pred_check_branch
        %265 = sbr.rel (%p262) target = $region36
      $region35: #{tpu_custom_call.1} parent=5 // pred_region
        %s266 = ssub.s32 %s21, 1
        %s267 = sand.u32 %s126, 1
        %s268 = scalar_lea.sflag [#allocation3], %s267
        %s269 = sand.u32 %s126, 1
        %s270 = smul.addr %s269, 64
        %s271 = scalar_lea.vmem [#allocation2], %s270
        // Predicated region
        $region37: #{tpu_custom_call.1} parent=35 // pred_check
          %p272 = pneg %p139
        $region38: #{tpu_custom_call.1} parent=35 // pred_check_branch
          %274 = sbr.rel (%p272) target = $region40
        $region39: #{tpu_custom_call.1} parent=35 // pred_region
          %275 = dma.done %s268, 1024
        $region40: #{tpu_custom_call.1} parent=35 // pred_fallthru
          _
        %s276 = smul.u32 2, %s31
        %p277 = scmp.lt.s32.totalorder %s30, 1
        %s278 = scalar_select %p277, %s30, 1
        %p279 = scmp.lt.s32.totalorder %s276, 1
        %s280 = scalar_select %p279, %s276, 1
        %s281 = smul.addr %s278, 2
        %s282 = sadd.s32 %s280, %s281
        %s283 = smul.addr %s282, 8
        %s284 = scalar_lea.vmem %s0, %s283
        %p285 = pneg %p61
        %p286 = pneg %p58
        %p287 = scmp.lt.s32.totalorder %s30, 1
        %s288 = scalar_select %p287, %s30, 1
        %s289 = scalar_lea.vmem %s1, %s288
        %p290 = pneg %p87
        %p291 = pneg %p84
        %p292 = scmp.lt.s32.totalorder %s30, 1
        %s293 = scalar_select %p292, %s30, 1
        %s294 = scalar_lea.vmem %s2, %s293
        %p295 = pneg %p113
        %p296 = pneg %p110
        %s297 = sand.u32 %s126, 1
        %s298 = scalar_lea.sflag [#allocation3], %s297
        %s299 = sand.u32 %s126, 1
        %s300 = smul.addr %s299, 64
        %s301 = scalar_lea.vmem [#allocation2], %s300
        %p302 = pneg %p139
        %p303 = pneg %p136
        %p304 = pneg %p167
        %p305 = pneg %p164
        %s306 = sand.u32 %s154, 1
        %s307 = scalar_lea.sflag [#allocation4], %s306
        %s308 = sand.u32 %s154, 1
        %s309 = smul.addr %s308, 16
        %s310 = scalar_lea.vmem [#allocation5], %s309
        %p311 = pneg %p195
        %p312 = pneg %p192
        %s313 = sand.u32 %s182, 1
        %s314 = scalar_lea.sflag [#allocation7], %s313
        %s315 = sand.u32 %s182, 1
        %s316 = smul.addr %s315, 16
        %s317 = scalar_lea.vmem [#allocation6], %s316
        %s318 = smul.u32 2, %s31
        %p319 = scmp.lt.s32.totalorder %s30, 1
        %s320 = scalar_select %p319, %s30, 1
        %p321 = scmp.lt.s32.totalorder %s318, 1
        %s322 = scalar_select %p321, %s318, 1
        %s323 = smul.addr %s320, 2
        %s324 = sadd.s32 %s322, %s323
        %s325 = smul.addr %s324, 8
        %s326 = scalar_lea.vmem %s0, %s325
        %s327 = smul.u32 2, %s31
        %p328 = scmp.lt.s32.totalorder %s30, 1
        %s329 = scalar_select %p328, %s30, 1
        %s330 = scalar_lea.vmem %s1, %s329
        %p331 = scmp.lt.s32.totalorder %s30, 1
        %s332 = scalar_select %p331, %s30, 1
        %s333 = scalar_lea.vmem %s2, %s332
        %s334 = smul.u32 2, %s31
        %s335 = smul.u32 2, %s31
        %v337 = vld [vmem:[%s326] sm:$0xff]
        %v338 = vld [vmem:[%s326 + $0x8] sm:$0xff]
        %v339 = vld [vmem:[%s330] sm:$0x1]
        %v340 = vld [vmem:[%s333] sm:$0x1]
        %342 = vset.pattern.permute.xlu0 0
        %343 = vperm.xlu0 %342, %v337
        %v344 = vpop.permute.xlu0 %343
        %347 = vset.pattern.permute.xlu0 0
        %348 = vperm.xlu0 %347, %v338
        %v349 = vpop.permute.xlu0 %348
        %v352 = vlaneseq
        %v353 = vshrl.u32 %v352, 7
        %v354 = vsub.s32 0, %v353
        %v355 = vrot.slane %v339, %v354
        %v357 = vsub.f32 %v344, %v355
        %v358 = vsub.f32 %v349, %v355
        %vm359 = vcmp.gt.f32.partialorder %v340, 0.0
        %v360 = vmul.f32 %v357, %v357
        %v361 = vmul.f32 %v358, %v358
        %v362 = vsub.f32 0.0, %v360
        %v363 = vsub.f32 0.0, %v361
        %v364 = vsel %vm359, 1, 0
        %v365 = vlaneseq
        %v366 = vshrl.u32 %v365, 7
        %v367 = vsub.s32 0, %v366
        %v368 = vrot.slane %v364, %v367
        %vm369 = vcmp.eq.s32.totalorder %v368, 1
        %v370 = vsel %vm369, %v362, -inf
        %v371 = vsel %vm369, %v363, -inf
        %372 = vmax.xlane.f32.xlu0 %v370
        %v373 = vpop.xlane.xlu0 %372
        %374 = vmax.xlane.f32.xlu0 %v371
        %v375 = vpop.xlane.xlu0 %374
        %v376 = vsub.f32 %v370, %v373
        %v377 = vsub.f32 %v371, %v375
        %v378 = vmul.f32 %v376, 1.442695
        %v379 = vpow.pop %v378
        %v380 = vmul.f32 %v377, 1.442695
        %v381 = vpow.pop %v380
        %382 = vadd.xlane.f32.xlu0 %v379
        %v383 = vpop.xlane.xlu0 %382
        %384 = vadd.xlane.f32.xlu0 %v381
        %v385 = vpop.xlane.xlu0 %384
        %v386 = vrcp.pop %v383
        %v387 = vrcp.pop %v385
        %v388 = vmul.f32 %v379, %v386
        %v389 = vmul.f32 %v381, %v387
        %390 = vst [vmem:[%s317] sm:$0xff] %v388
        %391 = vst [vmem:[%s317 + $0x8] sm:$0xff] %v389
        %v392 = vpack.c.bf16 %v389, %v388
        %v393 = vld [vmem:[%s271] sm:$0xf]
        %v394 = vld [vmem:[%s271 + $0x4] sm:$0xf]
        %v395 = vld [vmem:[%s271 + $0x8] sm:$0xf]
        %v396 = vld [vmem:[%s271 + $0xc] sm:$0xf]
        %v397 = vld [vmem:[%s271 + $0x10] sm:$0xf]
        %v398 = vld [vmem:[%s271 + $0x14] sm:$0xf]
        %v399 = vld [vmem:[%s271 + $0x18] sm:$0xf]
        %v400 = vld [vmem:[%s271 + $0x1c] sm:$0xf]
        %v401 = vld [vmem:[%s271 + $0x20] sm:$0xf]
        %v402 = vld [vmem:[%s271 + $0x24] sm:$0xf]
        %v403 = vld [vmem:[%s271 + $0x28] sm:$0xf]
        %v404 = vld [vmem:[%s271 + $0x2c] sm:$0xf]
        %v405 = vld [vmem:[%s271 + $0x30] sm:$0xf]
        %v406 = vld [vmem:[%s271 + $0x34] sm:$0xf]
        %v407 = vld [vmem:[%s271 + $0x38] sm:$0xf]
        %v408 = vld [vmem:[%s271 + $0x3c] sm:$0xf]
        %v425 = vunpack.c.l.b16 %v393
        %v426 = vunpack.c.l.b16 %v394
        %v427 = vunpack.c.l.b16 %v395
        %v428 = vunpack.c.l.b16 %v396
        %v429 = vunpack.c.l.b16 %v397
        %v430 = vunpack.c.l.b16 %v398
        %v431 = vunpack.c.l.b16 %v399
        %v432 = vunpack.c.l.b16 %v400
        %v433 = vunpack.c.l.b16 %v401
        %v434 = vunpack.c.l.b16 %v402
        %v435 = vunpack.c.l.b16 %v403
        %v436 = vunpack.c.l.b16 %v404
        %v437 = vunpack.c.l.b16 %v405
        %v438 = vunpack.c.l.b16 %v406
        %v439 = vunpack.c.l.b16 %v407
        %v440 = vunpack.c.l.b16 %v408
        %v441 = vpack.c.b16 %v426, %v425
        %v442 = vpack.c.b16 %v428, %v427
        %v443 = vpack.c.b16 %v430, %v429
        %v444 = vpack.c.b16 %v432, %v431
        %v445 = vpack.c.b16 %v434, %v433
        %v446 = vpack.c.b16 %v436, %v435
        %v447 = vpack.c.b16 %v438, %v437
        %v448 = vpack.c.b16 %v440, %v439
        %457 = vmatprep.subr.bf16.mxu0 0
        %458 = vmatpush1.bf16.msra.mxu0 %v448
        %459 = vmatprep.subr.bf16.mxu0 0
        %460 = vmatpush1.bf16.msra.mxu0 %v447
        %461 = vmatprep.subr.bf16.mxu0 0
        %462 = vmatpush1.bf16.msra.mxu0 %v446
        %463 = vmatprep.subr.bf16.mxu0 0
        %464 = vmatpush1.bf16.msra.mxu0 %v445
        %465 = vmatprep.subr.bf16.mxu0 0
        %466 = vmatpush1.bf16.msra.mxu0 %v444
        %467 = vmatprep.subr.bf16.mxu0 0
        %468 = vmatpush1.bf16.msra.mxu0 %v443
        %469 = vmatprep.subr.bf16.mxu0 0
        %470 = vmatpush1.bf16.msra.mxu0 %v442
        %471 = vmatprep.subr.bf16.mxu0 0
        %472 = vmatpush1.bf16.msra.mxu0 %v441
        %473 = vmatprep.subr.bf16.mxu0 0
        %474 = vmatpush2.bf16.msra.mxu0 0
        %475 = vmatprep.subr.bf16.mxu0 0
        %476 = vmatpush2.bf16.msra.mxu0 0
        %477 = vmatprep.subr.bf16.mxu0 0
        %478 = vmatpush2.bf16.msra.mxu0 0
        %479 = vmatprep.subr.bf16.mxu0 0
        %480 = vmatpush2.bf16.msra.mxu0 0
        %481 = vmatprep.subr.bf16.mxu0 0
        %482 = vmatpush2.bf16.msra.mxu0 0
        %483 = vmatprep.subr.bf16.mxu0 0
        %484 = vmatpush2.bf16.msra.mxu0 0
        %485 = vmatprep.subr.bf16.mxu0 0
        %486 = vmatpush2.bf16.msra.mxu0 0
        %487 = vmatprep.subr.bf16.mxu0 0
        %488 = vmatpush2.bf16.msra.mxu0 0
        %489 = vmatprep.mubr.bf16.mxu0 0
        %490 = vmatmul.mubr.bf16.gmra.mxu0 %v392
        %v491 = vpop.f32.mrf.mxu0
        %v492 = vadd.f32 0.0, %v491
        %v493 = vpop.f32.mrf.mxu0
        %v494 = vpop.f32.mrf.mxu0
        %v495 = vadd.f32 0.0, %v494
        %v496 = vpop.f32.mrf.mxu0
        %497 = vdwg.mxu0
        %498 = vst [vmem:[%s310] sm:$0xff] %v492
        %499 = vst [vmem:[%s310 + $0x8] sm:$0xff] %v495
        %s500 = sand.u32 %s154, 1
        %s501 = scalar_lea.sflag [#allocation4], %s500
        %s502 = sand.u32 %s154, 1
        %s503 = smul.addr %s502, 16
        %s504 = scalar_lea.vmem [#allocation5], %s503
        %s505 = sand.u32 %s182, 1
        %s506 = scalar_lea.sflag [#allocation7], %s505
        %s507 = sand.u32 %s182, 1
        %s508 = smul.addr %s507, 16
        %s509 = scalar_lea.vmem [#allocation6], %s508
        // Predicated region
        $region41: #{tpu_custom_call.1} parent=35 // pred_check
          %p510 = pneg %p164
        $region42: #{tpu_custom_call.1} parent=35 // pred_check_branch
          %512 = sbr.rel (%p510) target = $region44
        $region43: #{tpu_custom_call.1} parent=35 // pred_region
          %s513 = smul.u32 2, %s31
          %s515 = ssub.s32 256, 256
          %516 = vsyncadd %s501, %s515
          %s517 = smul.addr %s30, 2
          %s518 = sadd.s32 %s513, %s517
          %s519 = smul.addr %s518, 128
          %s520 = scalar_lea.hbm %s4, %s519
          %s521 = sshll.u32 %s504, 4
          %s522 = int_to_ptr.vmem [resolvable:$true] %s521
          %527 = dma.vmem_to_hbm [thread:$0]  %s522, 256, %s520, %s501, 128, 128, 8
        $region44: #{tpu_custom_call.1} parent=35 // pred_fallthru
          _
        // Predicated region
        $region45: #{tpu_custom_call.1} parent=35 // pred_check
          %p528 = pneg %p192
        $region46: #{tpu_custom_call.1} parent=35 // pred_check_branch
          %530 = sbr.rel (%p528) target = $region48
        $region47: #{tpu_custom_call.1} parent=35 // pred_region
          %s531 = smul.u32 2, %s31
          %s533 = ssub.s32 256, 256
          %534 = vsyncadd %s506, %s533
          %s535 = smul.addr %s30, 2
          %s536 = sadd.s32 %s531, %s535
          %s537 = smul.addr %s536, 128
          %s538 = scalar_lea.hbm %s5, %s537
          %s539 = sshll.u32 %s509, 4
          %s540 = int_to_ptr.vmem [resolvable:$true] %s539
          %545 = dma.vmem_to_hbm [thread:$0]  %s540, 256, %s538, %s506, 128, 128, 8
        $region48: #{tpu_custom_call.1} parent=35 // pred_fallthru
          _
      $region36: #{tpu_custom_call.1} parent=5 // pred_fallthru
        _
      %p546 = scmp.le.s32.totalorder 2, %s21
      // Predicated region
      $region49: #{tpu_custom_call.1} parent=5 // pred_check
        %p547 = pneg %p546
      $region50: #{tpu_custom_call.1} parent=5 // pred_check_branch
        %549 = sbr.rel (%p547) target = $region52
      $region51: #{tpu_custom_call.1} parent=5 // pred_region
        %s550 = ssub.s32 %s21, 2
        // Predicated region
        $region53: #{tpu_custom_call.1} parent=51 // pred_check
          %p551 = pneg %p170
        $region54: #{tpu_custom_call.1} parent=51 // pred_check_branch
          %553 = sbr.rel (%p551) target = $region56
        $region55: #{tpu_custom_call.1} parent=51 // pred_region
          %s554 = sand.u32 %s155, 1
          %s555 = scalar_lea.sflag [#allocation4], %s554
          %s556 = sand.u32 %s155, 1
          %s557 = smul.addr %s556, 16
          %s558 = scalar_lea.vmem [#allocation5], %s557
          %559 = dma.done %s555, 256
        $region56: #{tpu_custom_call.1} parent=51 // pred_fallthru
          _
        // Predicated region
        $region57: #{tpu_custom_call.1} parent=51 // pred_check
          %p560 = pneg %p198
        $region58: #{tpu_custom_call.1} parent=51 // pred_check_branch
          %562 = sbr.rel (%p560) target = $region60
        $region59: #{tpu_custom_call.1} parent=51 // pred_region
          %s563 = sand.u32 %s183, 1
          %s564 = scalar_lea.sflag [#allocation7], %s563
          %s565 = sand.u32 %s183, 1
          %s566 = smul.addr %s565, 16
          %s567 = scalar_lea.vmem [#allocation6], %s566
          %568 = dma.done %s564, 256
        $region60: #{tpu_custom_call.1} parent=51 // pred_fallthru
          _
      $region52: #{tpu_custom_call.1} parent=5 // pred_fallthru
        _
    $region6: #{tpu_custom_call.1} parent=1 // loop_footer
      %s25 = sadd.s32 1, %s21
    $region7: #{tpu_custom_call.1} parent=1 // loop_footer_branch
      %20 = sbr.rel target = $region3
    $region8: #{tpu_custom_call.1} parent=1 // loop_exit
      _
    %569 = vsyncpa [#allocation3], 1
    %s570 = scalar_lea.sflag [#allocation3], 1
    %571 = vsyncpa %s570, 1
    %572 = vsyncpa [#allocation4], 1
    %s573 = scalar_lea.sflag [#allocation4], 1
    %574 = vsyncpa %s573, 1
    %575 = vsyncpa [#allocation7], 1
    %s576 = scalar_lea.sflag [#allocation7], 1
    %577 = vsyncpa %s576, 1

</llo_original>
